<compile_context>
chip_gen: v7x
topology: tpu7x:2x2x1
jax: 0.10.0
libtpu: 0.0.40
codegen_flags: <defaults>
</compile_context>

<pallas_src>
import math

import jax
import jax.numpy as jnp
from jax.experimental import pallas as pl
from jax.experimental.pallas import tpu as pltpu


def _initial_params(num_rbf: int, rbound_upper: float, rbound_lower: float = 0.0):
    """Deterministic buffer init, matching the PyTorch _initial_params."""
    start_value = math.exp(-rbound_upper)
    end_value = math.exp(-rbound_lower)
    means = jnp.linspace(start_value, end_value, num_rbf, dtype=jnp.float32)
    beta_val = (2.0 / num_rbf * (end_value - start_value)) ** (-2)
    betas = jnp.full((num_rbf,), beta_val, dtype=jnp.float32)
    return means, betas


def _round_up(x: int, m: int) -> int:
    return ((x + m - 1) // m) * m


def _rbf_dense_kernel(dist_ref, means_ref, neg_betas_ref, out_ref):
    # dist_ref      : (tm, g)     g edges packed per dense row
    # means_ref     : (1, g*R)    means tiled g times along lanes (resident)
    # neg_betas_ref : (1, g*R)    -betas tiled g times along lanes (resident)
    # out_ref       : (tm, g*R)   lane-dense output tile
    tm, g = dist_ref.shape
    lane_width = out_ref.shape[1]
    r = lane_width // g

    ed = jnp.exp(-dist_ref[...])                                   # (tm, g)   EUP
    if g == 1:
        ed_wide = jnp.broadcast_to(ed[:, 0:1], (tm, lane_width))
    else:
        # Exact expansion: lanes [c*R:(c+1)*R] <- column c (VPU/XLU, no rounding).
        parts = [jnp.broadcast_to(ed[:, c:c + 1], (tm, r)) for c in range(g)]
        ed_wide = jnp.concatenate(parts, axis=-1)                  # (tm, g*R)

    diff = ed_wide - means_ref[...]
    sq = diff * diff
    out_ref[...] = jnp.exp(neg_betas_ref[...] * sq).astype(out_ref.dtype)


def new_exp_normal_smearing(dist, means, betas, *, tile_rows: int = 2048,
                            out_dtype=jnp.float32, min_pallas_edges: int = 4096):
    """dist: (E, 1) or (E,) f32; means/betas: (R,) f32  ->  (E, R) out_dtype."""
    if dist.ndim == 1:
        dist = dist[:, None]
    E = dist.shape[0]
    R = means.shape[0]
    assert dist.shape == (E, 1)
    dist = dist.astype(jnp.float32)
    means = means.astype(jnp.float32)
    betas = betas.astype(jnp.float32)

    # Pick the lane-packing factor g so the output lane width is a multiple of 128.
    if R % 128 == 0:
        g = 1
    elif 128 % R == 0:
        g = 128 // R
    else:
        g = 0  # awkward R: use fused-XLA fallback below

    # Tiny problems (or awkward R): plain fused XLA beats pallas_call overhead
    # plus the pad / slice copies.
    # TODO(synk): add a padded-lane Pallas fallback for R that does not tile 128.
    if E < min_pallas_edges or g == 0:
        out = jnp.exp(-betas[None, :] * jnp.square(jnp.exp(-dist) - means[None, :]))
        return out.astype(out_dtype)

    lane_width = g * R
    rows = pl.cdiv(E, g)
    # Big tiles (amortize ~0.35us/step) but keep >= ~8 grid steps so the
    # "parallel" axis can be sharded across v7x's two TensorCores.
    tm = max(8, min(tile_rows, _round_up(pl.cdiv(rows, 8), 8)))
    rows_pad = _round_up(rows, tm)
    e_pad = rows_pad * g

    dflat = dist.reshape(E)
    if e_pad != E:
        dflat = jnp.pad(dflat, (0, e_pad - E))
    dist_dense = dflat.reshape(rows_pad, g)

    means_t = jnp.tile(means, g).reshape(1, lane_width)
    neg_betas_t = jnp.tile(-betas, g).reshape(1, lane_width)   # negation hoisted out

    out = pl.pallas_call(
        _rbf_dense_kernel,
        out_shape=jax.ShapeDtypeStruct((rows_pad, lane_width), out_dtype),
        grid_spec=pltpu.PrefetchScalarGridSpec(
            num_scalar_prefetch=0,
            grid=(rows_pad // tm,),
            in_specs=[
                pl.BlockSpec((tm, g), lambda i: (i, 0)),            # dist tile
                pl.BlockSpec((1, lane_width), lambda i: (0, 0)),    # means   (resident)
                pl.BlockSpec((1, lane_width), lambda i: (0, 0)),    # -betas  (resident)
            ],
            out_specs=pl.BlockSpec((tm, lane_width), lambda i: (i, 0)),
        ),
        compiler_params=pltpu.CompilerParams(
            dimension_semantics=("parallel",),
            vmem_limit_bytes=32 * 1024 * 1024,  # explicit headroom (v5e default is 16 MiB)
        ),
    )(dist_dense, means_t, neg_betas_t)

    # (rows_pad, g*R) is byte-identical to (rows_pad*g, R): reshape is metadata-only.
    out = out.reshape(e_pad, R)
    return out if e_pad == E else out[:E]


def reference(dist, means, betas):
    return jnp.exp(-betas[None, :] * jnp.square(jnp.exp(-dist) - means[None, :]))


if __name__ == "__main__":
    num_rbf = 32
    rbound_upper = 5.0
    rbound_lower = 0.0

    means, betas = _initial_params(num_rbf, rbound_upper, rbound_lower)
    key = jax.random.PRNGKey(0)

    # Exercise the Pallas path (force it even at small E), including a ragged E
    # that requires padding and a multi-step grid.
    for E in (256, 1000):
        dist = jax.random.uniform(jax.random.fold_in(key, E), (E, 1),
                                  dtype=jnp.float32, minval=0.0, maxval=rbound_upper)
        out = jax.block_until_ready(
            new_exp_normal_smearing(dist, means, betas, min_pallas_edges=0))
        ref = reference(dist, means, betas)
        assert out.shape == (E, num_rbf)
        assert jnp.allclose(out, ref, atol=1e-5, rtol=1e-5), f"mismatch vs reference at E={E}"

    # Small-E dispatch path (plain fused XLA) sanity check.
    dist_small = jax.random.uniform(key, (64, 1), dtype=jnp.float32,
                                    minval=0.0, maxval=rbound_upper)
    out_small = jax.block_until_ready(new_exp_normal_smearing(dist_small, means, betas))
    assert jnp.allclose(out_small, reference(dist_small, means, betas), atol=1e-5, rtol=1e-5)

    print("KERNEL_OK")
</pallas_src>

<mosaic_0001>
module attributes {stable_mosaic.version = 11 : i64} {
  func.func @_rbf_dense_kernel(%arg0: i32, %arg1: memref<8x4xf32, #tpu.memory_space<vmem>>, %arg2: memref<1x128xf32, #tpu.memory_space<vmem>>, %arg3: memref<1x128xf32, #tpu.memory_space<vmem>>, %arg4: memref<8x128xf32, #tpu.memory_space<vmem>>) attributes {dimension_semantics = [#tpu.dimension_semantics<parallel>], iteration_bounds = array<i64: 8>, scalar_prefetch = 0 : i64, scratch_operands = 0 : i64, tpu.core_type = #tpu.core_type<tc>, window_params = [{transform_indices = @transform_0, window_bounds = array<i64: 8, 4>}, {pipeline_mode = #tpu.pipeline_mode<synchronous>, transform_indices = @transform_1, window_bounds = array<i64: 1, 128>}, {pipeline_mode = #tpu.pipeline_mode<synchronous>, transform_indices = @transform_2, window_bounds = array<i64: 1, 128>}, {transform_indices = @transform_3, window_bounds = array<i64: 8, 128>}]} {
    %c0 = arith.constant 0 : index
    %c0_0 = arith.constant 0 : index
    %0 = vector.load %arg1[%c0, %c0_0] : memref<8x4xf32, #tpu.memory_space<vmem>>, vector<8x4xf32>
    %cst = arith.constant 0.000000e+00 : f32
    %1 = vector.broadcast %cst : f32 to vector<8x4xf32>
    %2 = arith.subf %1, %0 : vector<8x4xf32>
    %3 = math.exp %2 : vector<8x4xf32>
    %4 = vector.extract_strided_slice %3 {offsets = [0, 0], sizes = [8, 1], strides = [1, 1]} : vector<8x4xf32> to vector<8x1xf32>
    %5 = vector.shape_cast %4 : vector<8x1xf32> to vector<8x1xf32>
    %6 = vector.broadcast %5 : vector<8x1xf32> to vector<8x32xf32>
    %7 = vector.extract_strided_slice %3 {offsets = [0, 1], sizes = [8, 1], strides = [1, 1]} : vector<8x4xf32> to vector<8x1xf32>
    %8 = vector.shape_cast %7 : vector<8x1xf32> to vector<8x1xf32>
    %9 = vector.broadcast %8 : vector<8x1xf32> to vector<8x32xf32>
    %10 = vector.extract_strided_slice %3 {offsets = [0, 2], sizes = [8, 1], strides = [1, 1]} : vector<8x4xf32> to vector<8x1xf32>
    %11 = vector.shape_cast %10 : vector<8x1xf32> to vector<8x1xf32>
    %12 = vector.broadcast %11 : vector<8x1xf32> to vector<8x32xf32>
    %13 = vector.extract_strided_slice %3 {offsets = [0, 3], sizes = [8, 1], strides = [1, 1]} : vector<8x4xf32> to vector<8x1xf32>
    %14 = vector.shape_cast %13 : vector<8x1xf32> to vector<8x1xf32>
    %15 = vector.broadcast %14 : vector<8x1xf32> to vector<8x32xf32>
    %16 = tpu.concatenate %6, %9, %12, %15 in 1 : vector<8x32xf32>, vector<8x32xf32>, vector<8x32xf32>, vector<8x32xf32> -> vector<8x128xf32>
    %c0_1 = arith.constant 0 : index
    %c0_2 = arith.constant 0 : index
    %17 = vector.load %arg2[%c0_1, %c0_2] : memref<1x128xf32, #tpu.memory_space<vmem>>, vector<1x128xf32>
    %18 = vector.broadcast %17 : vector<1x128xf32> to vector<8x128xf32>
    %19 = arith.subf %16, %18 : vector<8x128xf32>
    %20 = arith.mulf %19, %19 : vector<8x128xf32>
    %c0_3 = arith.constant 0 : index
    %c0_4 = arith.constant 0 : index
    %21 = vector.load %arg3[%c0_3, %c0_4] : memref<1x128xf32, #tpu.memory_space<vmem>>, vector<1x128xf32>
    %22 = vector.broadcast %21 : vector<1x128xf32> to vector<8x128xf32>
    %23 = arith.mulf %22, %20 : vector<8x128xf32>
    %24 = math.exp %23 : vector<8x128xf32>
    %c0_5 = arith.constant 0 : index
    %c0_6 = arith.constant 0 : index
    %25 = vector.load %arg4[%c0_5, %c0_6] : memref<8x128xf32, #tpu.memory_space<vmem>>, vector<8x128xf32>
    tpu.vector_store %arg4[%c0_5, %c0_6], %24 {strides = array<i32>} : memref<8x128xf32, #tpu.memory_space<vmem>>, vector<8x128xf32>,
    return
  }
  func.func @transform_0(%arg0: i32) -> (i32, i32) {
    %c0_i32 = arith.constant 0 : i32
    %c0_i32_0 = arith.constant 0 : i32
    return %arg0, %c0_i32 : i32, i32
  }
  func.func @transform_1(%arg0: i32) -> (i32, i32) {
    %c0_i32 = arith.constant 0 : i32
    %c0_i32_0 = arith.constant 0 : i32
    %c0_i32_1 = arith.constant 0 : i32
    return %c0_i32, %c0_i32_0 : i32, i32
  }
  func.func @transform_2(%arg0: i32) -> (i32, i32) {
    %c0_i32 = arith.constant 0 : i32
    %c0_i32_0 = arith.constant 0 : i32
    %c0_i32_1 = arith.constant 0 : i32
    return %c0_i32, %c0_i32_0 : i32, i32
  }
  func.func @transform_3(%arg0: i32) -> (i32, i32) {
    %c0_i32 = arith.constant 0 : i32
    %c0_i32_0 = arith.constant 0 : i32
    return %arg0, %c0_i32 : i32, i32
  }
}

</mosaic_0001>

<llo_original>
// kernel: tpu_custom_call.1
$region0: #{tpu_custom_call.1}
  #allocation0 [shape = 'u32[]', space=smem, size = 0x4, offset = 0x4, fixed_abs, tag = 'smem constant byte address 0x4 - core index']
  #allocation1 [shape = 'u32[144,128]{1,0:T(1,128)}', space=vmem, size = 0x12000, scoped, tag = 'internal scratch']
  %s0 = inlined_call_operand.vmem [shape: f32[64,4], index: 0, kind: input, shape index: {}]
  %s1 = inlined_call_operand.vmem [shape: f32[1,128], index: 1, kind: input, shape index: {}]
  %s2 = inlined_call_operand.vmem [shape: f32[1,128], index: 2, kind: input, shape index: {}]
  %s3 = inlined_call_operand.hbm [shape: f32[64,128], index: 3, kind: output, shape index: {}]
  %s4 = sld [smem:[#allocation0]]
  $region45: #{tpu_custom_call.1} parent=0
    _
  %s6 = ssub.s32 1, %s4
  %s7 = scalar_select 0, %s6, %s4
  $region1: #{tpu_custom_call.1} parent=0
    #allocation2 [shape = 'u8[8192]{0}', space=vmem, size = 0x2000, scoped, tag = 'output window, operand 0']
    #allocation3 [shape = 's32[2]{0}', space=sflag, size = 0x8, scoped, tag = 'scoped memory for tpu_custom_call.1']
    %8 = vsyncpa [#allocation3], 0
    %s9 = scalar_lea.sflag [#allocation3], 1
    %10 = vsyncpa %s9, 0
    loop: start=0, step=1, limit=10
    $region2: #{tpu_custom_call.1} parent=1 // loop_pre_header
      _
    $region3: #{tpu_custom_call.1} parent=1 // loop_header
      %s12 = sphi 0, %s16
      %p13 = scmp.ge.s32.totalorder %s12, 10
      %s22 = sphi 0, %s24
      %s25 = sphi 0, %s22
      %s26 = sphi 0, %s25
      %s42 = sphi 0, %s26
      %s46 = sphi 0, %s46
      %s48 = sphi 0, %s46
      %s49 = sphi 0, %s48
      %s63 = sphi 0, %s49
      %s67 = sphi 0, %s67
      %s69 = sphi 0, %s67
      %s70 = sphi 0, %s69
      %s84 = sphi 0, %s70
      %s90 = sphi 0, %s92
      %s93 = sphi 0, %s90
      %s94 = sphi 0, %s93
      %s110 = sphi 0, %s94
    $region4: #{tpu_custom_call.1} parent=1 // loop_header_branch
      %15 = sbr.rel (%p13) target = $region8
    $region5: #{tpu_custom_call.1} parent=1 // loop_body
      %s17 = ssub.s32 %s12, 1
      %s18 = ssub.s32 %s12, 2
      %s19 = sadd.s32 %s12, 1
      %s20 = ssub.s32 %s12, %s19
      %p21 = scmp.eq.s32.totalorder %s20, 0
      %s23 = sadd.s32 %s22, 1
      %s24 = scalar_select %p21, %s22, %s23
      %p27 = pneg %p21
      %p28 = scmp.eq.s32.totalorder %s12, 7
      %p29 = por %p27, %p28
      %p30 = scmp.ne.s32.totalorder %s22, %s25
      %p31 = scmp.eq.s32.totalorder %s12, 0
      %p32 = por %p30, %p31
      %p33 = scmp.ne.s32.totalorder %s22, %s25
      %p34 = scmp.eq.s32.totalorder %s17, 7
      %p35 = por %p33, %p34
      %p36 = scmp.ne.s32.totalorder %s25, %s26
      %p37 = scmp.eq.s32.totalorder %s17, 0
      %p38 = por %p36, %p37
      %p39 = scmp.ne.s32.totalorder %s25, %s26
      %p40 = scmp.eq.s32.totalorder %s18, 7
      %p41 = por %p39, %p40
      %p43 = scmp.ne.s32.totalorder %s26, %s42
      %p44 = scmp.eq.s32.totalorder %s18, 0
      %p45 = por %p43, %p44
      %s47 = sadd.s32 %s46, 1
      %p50 = scmp.eq.s32.totalorder %s12, 7
      %p51 = scmp.ne.s32.totalorder %s46, %s48
      %p52 = scmp.eq.s32.totalorder %s12, 0
      %p53 = por %p51, %p52
      %p54 = scmp.ne.s32.totalorder %s46, %s48
      %p55 = scmp.eq.s32.totalorder %s17, 7
      %p56 = por %p54, %p55
      %p57 = scmp.ne.s32.totalorder %s48, %s49
      %p58 = scmp.eq.s32.totalorder %s17, 0
      %p59 = por %p57, %p58
      %p60 = scmp.ne.s32.totalorder %s48, %s49
      %p61 = scmp.eq.s32.totalorder %s18, 7
      %p62 = por %p60, %p61
      %p64 = scmp.ne.s32.totalorder %s49, %s63
      %p65 = scmp.eq.s32.totalorder %s18, 0
      %p66 = por %p64, %p65
      %s68 = sadd.s32 %s67, 1
      %p71 = scmp.eq.s32.totalorder %s12, 7
      %p72 = scmp.ne.s32.totalorder %s67, %s69
      %p73 = scmp.eq.s32.totalorder %s12, 0
      %p74 = por %p72, %p73
      %p75 = scmp.ne.s32.totalorder %s67, %s69
      %p76 = scmp.eq.s32.totalorder %s17, 7
      %p77 = por %p75, %p76
      %p78 = scmp.ne.s32.totalorder %s69, %s70
      %p79 = scmp.eq.s32.totalorder %s17, 0
      %p80 = por %p78, %p79
      %p81 = scmp.ne.s32.totalorder %s69, %s70
      %p82 = scmp.eq.s32.totalorder %s18, 7
      %p83 = por %p81, %p82
      %p85 = scmp.ne.s32.totalorder %s70, %s84
      %p86 = scmp.eq.s32.totalorder %s18, 0
      %p87 = por %p85, %p86
      %s88 = ssub.s32 %s12, %s19
      %p89 = scmp.eq.s32.totalorder %s88, 0
      %s91 = sadd.s32 %s90, 1
      %s92 = scalar_select %p89, %s90, %s91
      %p95 = pneg %p89
      %p96 = scmp.eq.s32.totalorder %s12, 7
      %p97 = por %p95, %p96
      %p98 = scmp.ne.s32.totalorder %s90, %s93
      %p99 = scmp.eq.s32.totalorder %s12, 0
      %p100 = por %p98, %p99
      %p101 = scmp.ne.s32.totalorder %s90, %s93
      %p102 = scmp.eq.s32.totalorder %s17, 7
      %p103 = por %p101, %p102
      %p104 = scmp.ne.s32.totalorder %s93, %s94
      %p105 = scmp.eq.s32.totalorder %s17, 0
      %p106 = por %p104, %p105
      %p107 = scmp.ne.s32.totalorder %s93, %s94
      %p108 = scmp.eq.s32.totalorder %s18, 7
      %p109 = por %p107, %p108
      %p111 = scmp.ne.s32.totalorder %s94, %s110
      %p112 = scmp.eq.s32.totalorder %s18, 0
      %p113 = por %p111, %p112
      %p114 = scmp.le.s32.totalorder 1, %s12
      %p115 = scmp.lt.s32.totalorder %s12, 9
      %p116 = pnand %p114, %p115
      %p117 = pneg %p116
      // Predicated region
      $region9: #{tpu_custom_call.1} parent=5 // pred_check
        _
      $region10: #{tpu_custom_call.1} parent=5 // pred_check_branch
        %119 = sbr.rel (%p116) target = $region12
      $region11: #{tpu_custom_call.1} parent=5 // pred_region
        %s120 = ssub.s32 %s12, 1
        // Predicated region
        $region13: #{tpu_custom_call.1} parent=11 // pred_check
          %p121 = pneg %p59
        $region14: #{tpu_custom_call.1} parent=11 // pred_check_branch
          %123 = sbr.rel (%p121) target = $region16
        $region15: #{tpu_custom_call.1} parent=11 // pred_region
          _
        $region16: #{tpu_custom_call.1} parent=11 // pred_fallthru
          _
        // Predicated region
        $region17: #{tpu_custom_call.1} parent=11 // pred_check
          %p124 = pneg %p80
        $region18: #{tpu_custom_call.1} parent=11 // pred_check_branch
          %126 = sbr.rel (%p124) target = $region20
        $region19: #{tpu_custom_call.1} parent=11 // pred_region
          _
        $region20: #{tpu_custom_call.1} parent=11 // pred_fallthru
          _
      $region12: #{tpu_custom_call.1} parent=5 // pred_fallthru
        _
      %p127 = scmp.lt.s32.totalorder %s12, 8
      // Predicated region
      $region21: #{tpu_custom_call.1} parent=5 // pred_check
        %p128 = pneg %p127
      $region22: #{tpu_custom_call.1} parent=5 // pred_check_branch
        %130 = sbr.rel (%p128) target = $region24
      $region23: #{tpu_custom_call.1} parent=5 // pred_region
        // Predicated region
        $region25: #{tpu_custom_call.1} parent=23 // pred_check
          %p131 = pneg %p32
        $region26: #{tpu_custom_call.1} parent=23 // pred_check_branch
          %133 = sbr.rel (%p131) target = $region28
        $region27: #{tpu_custom_call.1} parent=23 // pred_region
          %p134 = scmp.lt.s32.totalorder %s12, 7
          %s135 = scalar_select %p134, %s12, 7
          %s136 = smul.addr %s135, 8
          %s137 = scalar_lea.vmem %s0, %s136
        $region28: #{tpu_custom_call.1} parent=23 // pred_fallthru
          _
      $region24: #{tpu_custom_call.1} parent=5 // pred_fallthru
        _
      %p138 = scmp.le.s32.totalorder 1, %s12
      %p139 = scmp.lt.s32.totalorder %s12, 9
      %p140 = pnand %p138, %p139
      %p141 = pneg %p140
      // Predicated region
      $region29: #{tpu_custom_call.1} parent=5 // pred_check
        _
      $region30: #{tpu_custom_call.1} parent=5 // pred_check_branch
        %143 = sbr.rel (%p140) target = $region32
      $region31: #{tpu_custom_call.1} parent=5 // pred_region
        %s144 = ssub.s32 %s12, 1
        %p145 = scmp.lt.s32.totalorder %s17, 7
        %s146 = scalar_select %p145, %s17, 7
        %s147 = smul.addr %s146, 8
        %s148 = scalar_lea.vmem %s0, %s147
        %p149 = pneg %p38
        %p150 = pneg %p35
        %p151 = pneg %p59
        %p152 = pneg %p56
        %p153 = pneg %p80
        %p154 = pneg %p77
        %p155 = pneg %p106
        %p156 = pneg %p103
        %s157 = sand.u32 %s93, 1
        %s158 = scalar_lea.sflag [#allocation3], %s157
        %s159 = sand.u32 %s93, 1
        %s160 = smul.addr %s159, 8
        %s161 = scalar_lea.vmem [#allocation2], %s160
        %p162 = scmp.lt.s32.totalorder %s17, 7
        %s163 = scalar_select %p162, %s17, 7
        %s164 = smul.addr %s163, 8
        %s165 = scalar_lea.vmem %s0, %s164
        %v166 = vld [vmem:[%s165] sm:$0xff]
        %v167 = vsub.f32 0.0, %v166
        %v168 = vmul.f32 %v167, 1.442695
        %v169 = vpow.pop %v168
        %171 = vset.pattern.permute.xlu0 0
        %172 = vperm.xlu0 %171, %v169
        %v173 = vpop.permute.xlu0 %172
        %175 = vset.pattern.permute.xlu0 1
        %176 = vperm.xlu0 %175, %v169
        %v177 = vpop.permute.xlu0 %176
        %179 = vset.pattern.permute.xlu0 2
        %180 = vperm.xlu0 %179, %v169
        %v181 = vpop.permute.xlu0 %180
        %183 = vset.pattern.permute.xlu0 3
        %184 = vperm.xlu0 %183, %v169
        %v185 = vpop.permute.xlu0 %184
        %vm187 = vcmask 261120
        %v188 = vsel %vm187, %v173, %v177
        %vm189 = vcmask 523264
        %v190 = vsel %vm189, %v188, %v181
        %vm191 = vcmask 785408
        %v192 = vsel %vm191, %v190, %v185
        %v193 = vld [vmem:[%s1] sm:$0x1]
        %v195 = vlaneseq
        %v196 = vshrl.u32 %v195, 7
        %v197 = vsub.s32 0, %v196
        %v198 = vrot.slane %v193, %v197
        %v200 = vsub.f32 %v192, %v198
        %v201 = vmul.f32 %v200, %v200
        %v202 = vld [vmem:[%s2] sm:$0x1]
        %v204 = vlaneseq
        %v205 = vshrl.u32 %v204, 7
        %v206 = vsub.s32 0, %v205
        %v207 = vrot.slane %v202, %v206
        %v209 = vmul.f32 %v207, %v201
        %v210 = vmul.f32 %v209, 1.442695
        %v211 = vpow.pop %v210
        %212 = vst [vmem:[%s161] sm:$0xff] %v211
        %s213 = sand.u32 %s93, 1
        %s214 = scalar_lea.sflag [#allocation3], %s213
        %s215 = sand.u32 %s93, 1
        %s216 = smul.addr %s215, 8
        %s217 = scalar_lea.vmem [#allocation2], %s216
        // Predicated region
        $region33: #{tpu_custom_call.1} parent=31 // pred_check
          %p218 = pneg %p103
        $region34: #{tpu_custom_call.1} parent=31 // pred_check_branch
          %220 = sbr.rel (%p218) target = $region36
        $region35: #{tpu_custom_call.1} parent=31 // pred_region
          %s222 = ssub.s32 128, 128
          %223 = vsyncadd %s214, %s222
          %s224 = smul.addr %s17, 128
          %s225 = scalar_lea.hbm %s3, %s224
          %s227 = sshll.u32 %s217, 4
          %s228 = int_to_ptr.vmem [resolvable:$true] %s227
          %230 = dma.vmem_to_hbm [thread:$0]  %s228, 128, %s225, %s214
        $region36: #{tpu_custom_call.1} parent=31 // pred_fallthru
          _
      $region32: #{tpu_custom_call.1} parent=5 // pred_fallthru
        _
      %p231 = scmp.le.s32.totalorder 2, %s12
      // Predicated region
      $region37: #{tpu_custom_call.1} parent=5 // pred_check
        %p232 = pneg %p231
      $region38: #{tpu_custom_call.1} parent=5 // pred_check_branch
        %234 = sbr.rel (%p232) target = $region40
      $region39: #{tpu_custom_call.1} parent=5 // pred_region
        %s235 = ssub.s32 %s12, 2
        // Predicated region
        $region41: #{tpu_custom_call.1} parent=39 // pred_check
          %p236 = pneg %p109
        $region42: #{tpu_custom_call.1} parent=39 // pred_check_branch
          %238 = sbr.rel (%p236) target = $region44
        $region43: #{tpu_custom_call.1} parent=39 // pred_region
          %s239 = sand.u32 %s94, 1
          %s240 = scalar_lea.sflag [#allocation3], %s239
          %s241 = sand.u32 %s94, 1
          %s242 = smul.addr %s241, 8
          %s243 = scalar_lea.vmem [#allocation2], %s242
          %244 = dma.done %s240, 128
        $region44: #{tpu_custom_call.1} parent=39 // pred_fallthru
          _
      $region40: #{tpu_custom_call.1} parent=5 // pred_fallthru
        _
    $region6: #{tpu_custom_call.1} parent=1 // loop_footer
      %s16 = sadd.s32 1, %s12
    $region7: #{tpu_custom_call.1} parent=1 // loop_footer_branch
      %11 = sbr.rel target = $region3
    $region8: #{tpu_custom_call.1} parent=1 // loop_exit
      _
    %245 = vsyncpa [#allocation3], 1
    %s246 = scalar_lea.sflag [#allocation3], 1
    %247 = vsyncpa %s246, 1

</llo_original>
